<compile_context>
chip_gen: v7x
topology: tpu7x:2x2x1
jax: 0.10.0
libtpu: 0.0.40
codegen_flags: <defaults>
</compile_context>

<pallas_src>
import jax
import jax.numpy as jnp
from jax import lax
from jax.experimental import pallas as pl
from jax.experimental.pallas import tpu as pltpu


# ---------------------------------------------------------------------------
# model dims (small, consistent with the module's __init__)
# ---------------------------------------------------------------------------
L = 8            # sequence length
N = 2            # batch
E = 32           # d_model
H = 4            # n_head
DH = E // H      # head dim
T = L * N        # tokens processed per invocation
HT = H * T       # lane width of the block-diagonal score matrix (64)
EPS = 1e-5
QGELU_C = 1.702
NEG_INF = -1e9

# vslab row layout (fp32, lane width 4*E = 128):
#   row 0     : [ g1 | b1 | g2 | b2 ]          (4 x E)
#   row 1     : [ bqkv (3E)         | bo (E) ]
#   row 2     : [ bfc (4E)                   ]
#   row 3     : [ bproj (E) | 0-pad          ]
#   rows 4..7 : zero padding (sublane-group alignment)
#   rows 8..23: same-batch additive attention bias (T, H*T), 0-padded to 4E lanes
_VROWS = 8 + T


def _layernorm(v, g, b):
    # torch LayerNorm: biased variance, eps inside sqrt, fp32 math
    v32 = v.astype(jnp.float32)
    mu = jnp.mean(v32, axis=-1, keepdims=True)
    var = jnp.mean((v32 - mu) ** 2, axis=-1, keepdims=True)
    return (v32 - mu) * lax.rsqrt(var + EPS) * g + b


def residual_block_kernel(x_ref, wslab_ref, wpslab_ref, vslab_ref, o_ref):
    x = x_ref[...]                                       # (T, E) fp32

    # ---- unpack parameter slabs (static slices of VMEM-resident refs) ------
    g1 = vslab_ref[0:1, 0:E]
    b1 = vslab_ref[0:1, E:2 * E]
    g2 = vslab_ref[0:1, 2 * E:3 * E]
    b2 = vslab_ref[0:1, 3 * E:4 * E]
    bqkv = vslab_ref[1:2, 0:3 * E]
    bo = vslab_ref[1:2, 3 * E:4 * E]
    bfc = vslab_ref[2:3, :]
    bproj = vslab_ref[3:4, 0:E]
    bias = vslab_ref[8:8 + T, 0:HT]                      # (T, HT) additive mask

    wqkv = wslab_ref[:, 0:3 * E]                         # (E, 3E) bf16
    wo = wslab_ref[:, 3 * E:4 * E]                       # (E, E)  bf16
    wfc = wslab_ref[:, 4 * E:8 * E]                      # (E, 4E) bf16
    wproj = wpslab_ref[0:4 * E, :]                       # (4E, E) bf16
    blk = wpslab_ref[4 * E:4 * E + HT, :]                # (HT, E) 0/1 block mask

    # ---------------- attention branch ---------------------------------------
    xn = _layernorm(x, g1, b1)                           # fp32 (T, E)
    qkv = jnp.dot(xn.astype(jnp.bfloat16), wqkv,
                  preferred_element_type=jnp.float32) + bqkv       # (T, 3E)
    q = qkv[:, 0:E].astype(jnp.bfloat16)
    k = qkv[:, E:2 * E].astype(jnp.bfloat16)
    v = qkv[:, 2 * E:3 * E].astype(jnp.bfloat16)

    # block-diagonal formulation: replicate K/V H times along sublanes and zero
    # the lanes outside each copy's head, so ALL heads (and both batch elements,
    # via the additive same-batch bias) run through one lane-dense matmul.
    km = jnp.concatenate([k] * H, axis=0) * blk          # (HT, E) bf16
    vm = jnp.concatenate([v] * H, axis=0) * blk          # (HT, E) bf16

    scores = lax.dot_general(q, km, (((1,), (1,)), ((), ())),
                             preferred_element_type=jnp.float32)   # (T, HT)
    scores = scores * (1.0 / (DH ** 0.5)) + bias

    # single softmax pass: row max over all head blocks is a valid shared
    # stabilizer; per-head denominators come from the 0/1 block-mask matmul
    # (already broadcast across each head's DH output lanes).
    m = jnp.max(scores, axis=-1, keepdims=True)
    p = jnp.exp(scores - m)                              # fp32 (T, HT)
    pb = p.astype(jnp.bfloat16)
    ctx_num = jnp.dot(pb, vm, preferred_element_type=jnp.float32)   # (T, E)
    denom = jnp.dot(pb, blk, preferred_element_type=jnp.float32)    # (T, E)
    ctx = ctx_num * pl.reciprocal(denom, approx=True)    # EUP reciprocal

    attn_out = jnp.dot(ctx.astype(jnp.bfloat16), wo,
                       preferred_element_type=jnp.float32) + bo
    x1 = x + attn_out                                    # residual 1

    # ---------------- MLP branch ----------------------------------------------
    xn2 = _layernorm(x1, g2, b2)
    hdn = jnp.dot(xn2.astype(jnp.bfloat16), wfc,
                  preferred_element_type=jnp.float32) + bfc          # (T, 4E)
    hdn = hdn * jax.nn.sigmoid(QGELU_C * hdn)            # QuickGELU (fp32)
    mlp_out = jnp.dot(hdn.astype(jnp.bfloat16), wproj,
                      preferred_element_type=jnp.float32) + bproj

    o_ref[...] = (x1 + mlp_out).astype(o_ref.dtype)      # residual 2


# ---------------------------------------------------------------------------
# host-side one-time parameter packing
# ---------------------------------------------------------------------------
def prepare_params(params):
    """Pack the 12 parameter tensors + precomputed attention masks into 3 slabs
    so the kernel needs 4 input DMAs instead of 13."""
    (g1, b1, wqkv_t, bqkv, wo_t, bo, g2, b2, wfc_t, bfc, wproj_t, bproj) = params

    # weight slab (E, 3E + E + 4E) = (32, 256) bf16: [Wqkv | Wo | Wfc]
    wslab = jnp.concatenate([wqkv_t, wo_t, wfc_t], axis=1).astype(jnp.bfloat16)

    # 0/1 head-block mask: row h*T+s keeps only head h's DH lanes
    row_head = jnp.arange(HT) // T
    col_head = jnp.arange(E) // DH
    blk = (row_head[:, None] == col_head[None, :]).astype(jnp.float32)   # (HT, E)
    # wproj + block mask slab (4E + HT, E) = (192, 32) bf16 (mask is exact 0/1)
    wpslab = jnp.concatenate([wproj_t, blk], axis=0).astype(jnp.bfloat16)

    # same-batch additive bias: token rows are (l, n) row-major -> batch = idx % N
    qb = jnp.arange(T) % N
    kb = jnp.tile(jnp.arange(T) % N, H)
    bias = jnp.where(qb[:, None] == kb[None, :], 0.0, NEG_INF).astype(jnp.float32)

    row0 = jnp.concatenate([g1, b1, g2, b2], axis=1)                     # (1, 128)
    row1 = jnp.concatenate([bqkv, bo], axis=1)                           # (1, 128)
    row2 = bfc                                                           # (1, 128)
    row3 = jnp.concatenate([bproj, jnp.zeros((1, 3 * E), jnp.float32)], axis=1)
    pad = jnp.zeros((4, 4 * E), jnp.float32)
    bias_pad = jnp.concatenate(
        [bias, jnp.zeros((T, 4 * E - HT), jnp.float32)], axis=1)         # (16, 128)
    vslab = jnp.concatenate([row0, row1, row2, row3, pad, bias_pad], axis=0)

    return (wslab, wpslab, vslab)


# ---------------------------------------------------------------------------
# wrapper
# ---------------------------------------------------------------------------
_FLOPS = (2 * T * E * 3 * E          # fused QKV projection
          + 2 * T * E * HT * 3       # scores + ctx + denom matmuls
          + 2 * T * E * E            # attention out-projection
          + 2 * T * E * 4 * E        # c_fc
          + 2 * T * 4 * E * E)       # c_proj
_TRANS = T * HT + T * 4 * E          # exp + sigmoid
_BYTES = (T * E * 4 * 2              # x in + out (fp32)
          + E * (8 * E) * 2          # weight slab (bf16)
          + (4 * E + HT) * E * 2     # wproj + block mask slab (bf16)
          + _VROWS * 4 * E * 4)      # vector/bias/mask slab (fp32)

_VMEM_SPEC = pl.BlockSpec(memory_space=pltpu.MemorySpace.VMEM)


@jax.jit
def residual_attention_block(x_lne, packed):
    """x_lne: (L, N, E) float32 — same layout as the PyTorch module input."""
    # (L, N, E) -> (L*N, E): contiguous (free) reshape, no transpose.
    x2d = x_lne.reshape(T, E)
    out2d = pl.pallas_call(
        residual_block_kernel,
        out_shape=jax.ShapeDtypeStruct((T, E), x_lne.dtype),
        in_specs=[_VMEM_SPEC] * 4,
        out_specs=_VMEM_SPEC,
        cost_estimate=pl.CostEstimate(
            flops=_FLOPS, transcendentals=_TRANS, bytes_accessed=_BYTES),
    )(x2d, *packed)
    return out2d.reshape(L, N, E)


# ---------------------------------------------------------------------------
# pure-JAX fp32 reference (same math as the PyTorch module, correctness oracle)
# ---------------------------------------------------------------------------
def reference_forward(x_lne, params):
    (g1, b1, wqkv_t, bqkv, wo_t, bo, g2, b2, wfc_t, bfc, wproj_t, bproj) = params

    def ln(v, g, b):
        mu = jnp.mean(v, -1, keepdims=True)
        var = jnp.mean((v - mu) ** 2, -1, keepdims=True)
        return (v - mu) / jnp.sqrt(var + EPS) * g + b

    x = jnp.transpose(x_lne, (1, 0, 2))                  # (N, L, E)
    xn = ln(x, g1, b1)
    qkv = xn @ wqkv_t + bqkv
    q, k, v = jnp.split(qkv, 3, axis=-1)

    def heads(t):  # (N, L, E) -> (N, H, L, DH)
        return t.reshape(N, L, H, DH).transpose(0, 2, 1, 3)

    qh, kh, vh = heads(q), heads(k), heads(v)
    scores = jnp.einsum("nhld,nhmd->nhlm", qh, kh) / (DH ** 0.5)
    p = jax.nn.softmax(scores, axis=-1)
    o = jnp.einsum("nhlm,nhmd->nhld", p, vh).transpose(0, 2, 1, 3).reshape(N, L, E)
    x1 = x + (o @ wo_t + bo)
    xn2 = ln(x1, g2, b2)
    hdn = xn2 @ wfc_t + bfc
    hdn = hdn * jax.nn.sigmoid(QGELU_C * hdn)
    out = x1 + (hdn @ wproj_t + bproj)
    return out.transpose(1, 0, 2)                        # (L, N, E)


if __name__ == "__main__":
    key = jax.random.PRNGKey(0)
    ks = jax.random.split(key, 8)

    x = jax.random.normal(ks[0], (L, N, E), dtype=jnp.float32)

    # deterministic synthetic parameters (stored transposed: y = x @ W^T + b)
    g1 = jnp.ones((1, E), jnp.float32)
    b1 = jnp.zeros((1, E), jnp.float32)
    g2 = jnp.ones((1, E), jnp.float32)
    b2 = jnp.zeros((1, E), jnp.float32)
    wqkv_t = jax.random.normal(ks[1], (E, 3 * E), jnp.float32) * 0.05
    bqkv = jax.random.normal(ks[2], (1, 3 * E), jnp.float32) * 0.01
    wo_t = jax.random.normal(ks[3], (E, E), jnp.float32) * 0.05
    bo = jax.random.normal(ks[4], (1, E), jnp.float32) * 0.01
    wfc_t = jax.random.normal(ks[5], (E, 4 * E), jnp.float32) * 0.05
    bfc = jax.random.normal(ks[6], (1, 4 * E), jnp.float32) * 0.01
    wproj_t = jax.random.normal(ks[7], (4 * E, E), jnp.float32) * 0.05
    bproj = jnp.zeros((1, E), jnp.float32)

    params = (g1, b1, wqkv_t, bqkv, wo_t, bo, g2, b2, wfc_t, bfc, wproj_t, bproj)
    packed = prepare_params(params)

    out = residual_attention_block(x, packed)
    out = jax.block_until_ready(out)

    ref = reference_forward(x, params)
    assert out.shape == (L, N, E)
    # bf16 matmul operands (fp32 accumulation) + approx softmax reciprocal vs.
    # the exact fp32 reference: observed error is a few 1e-3; assert at 2e-2.
    assert jnp.allclose(out, ref, atol=2e-2, rtol=2e-2), "mismatch vs reference"

    print("KERNEL_OK")
</pallas_src>

<mosaic_0001>
module attributes {stable_mosaic.version = 11 : i64} {
  func.func @residual_block_kernel(%arg0: memref<16x32xf32, #tpu.memory_space<vmem>>, %arg1: memref<32x256xbf16, #tpu.memory_space<vmem>>, %arg2: memref<192x32xbf16, #tpu.memory_space<vmem>>, %arg3: memref<24x128xf32, #tpu.memory_space<vmem>>, %arg4: memref<16x32xf32, #tpu.memory_space<vmem>>) attributes {dimension_semantics = [], scalar_prefetch = 0 : i64, scratch_operands = 0 : i64, tpu.core_type = #tpu.core_type<tc>} {
    %c0 = arith.constant 0 : index
    %c0_0 = arith.constant 0 : index
    %0 = vector.load %arg0[%c0, %c0_0] : memref<16x32xf32, #tpu.memory_space<vmem>>, vector<16x32xf32>
    %c0_1 = arith.constant 0 : index
    %c0_2 = arith.constant 0 : index
    %1 = vector.load %arg3[%c0_1, %c0_2] : memref<24x128xf32, #tpu.memory_space<vmem>>, vector<1x32xf32>
    %c0_3 = arith.constant 0 : index
    %c32 = arith.constant 32 : index
    %2 = vector.load %arg3[%c0_3, %c32] : memref<24x128xf32, #tpu.memory_space<vmem>>, vector<1x32xf32>
    %c0_4 = arith.constant 0 : index
    %c64 = arith.constant 64 : index
    %3 = vector.load %arg3[%c0_4, %c64] : memref<24x128xf32, #tpu.memory_space<vmem>>, vector<1x32xf32>
    %c0_5 = arith.constant 0 : index
    %c96 = arith.constant 96 : index
    %4 = vector.load %arg3[%c0_5, %c96] : memref<24x128xf32, #tpu.memory_space<vmem>>, vector<1x32xf32>
    %c1 = arith.constant 1 : index
    %c0_6 = arith.constant 0 : index
    %5 = vector.load %arg3[%c1, %c0_6] : memref<24x128xf32, #tpu.memory_space<vmem>>, vector<1x96xf32>
    %c1_7 = arith.constant 1 : index
    %c96_8 = arith.constant 96 : index
    %6 = vector.load %arg3[%c1_7, %c96_8] : memref<24x128xf32, #tpu.memory_space<vmem>>, vector<1x32xf32>
    %c2 = arith.constant 2 : index
    %c0_9 = arith.constant 0 : index
    %7 = vector.load %arg3[%c2, %c0_9] : memref<24x128xf32, #tpu.memory_space<vmem>>, vector<1x128xf32>
    %c3 = arith.constant 3 : index
    %c0_10 = arith.constant 0 : index
    %8 = vector.load %arg3[%c3, %c0_10] : memref<24x128xf32, #tpu.memory_space<vmem>>, vector<1x32xf32>
    %c8 = arith.constant 8 : index
    %c0_11 = arith.constant 0 : index
    %9 = vector.load %arg3[%c8, %c0_11] : memref<24x128xf32, #tpu.memory_space<vmem>>, vector<16x64xf32>
    %c0_12 = arith.constant 0 : index
    %c0_13 = arith.constant 0 : index
    %10 = vector.load %arg1[%c0_12, %c0_13] : memref<32x256xbf16, #tpu.memory_space<vmem>>, vector<32x96xbf16>
    %c0_14 = arith.constant 0 : index
    %c96_15 = arith.constant 96 : index
    %11 = vector.load %arg1[%c0_14, %c96_15] : memref<32x256xbf16, #tpu.memory_space<vmem>>, vector<32x32xbf16>
    %c0_16 = arith.constant 0 : index
    %c128 = arith.constant 128 : index
    %12 = vector.load %arg1[%c0_16, %c128] : memref<32x256xbf16, #tpu.memory_space<vmem>>, vector<32x128xbf16>
    %c0_17 = arith.constant 0 : index
    %c0_18 = arith.constant 0 : index
    %13 = vector.load %arg2[%c0_17, %c0_18] : memref<192x32xbf16, #tpu.memory_space<vmem>>, vector<128x32xbf16>
    %c128_19 = arith.constant 128 : index
    %c0_20 = arith.constant 0 : index
    %14 = vector.load %arg2[%c128_19, %c0_20] : memref<192x32xbf16, #tpu.memory_space<vmem>>, vector<64x32xbf16>
    %cst = arith.constant dense<0.000000e+00> : vector<16xf32>
    %15 = vector.multi_reduction <add>, %0, %cst [1] : vector<16x32xf32> to vector<16xf32>
    %16 = vector.shape_cast %15 : vector<16xf32> to vector<16x1xf32>
    %cst_21 = arith.constant 3.200000e+01 : f32
    %17 = vector.broadcast %cst_21 : f32 to vector<16x1xf32>
    %18 = arith.divf %16, %17 : vector<16x1xf32>
    %19 = vector.broadcast %18 : vector<16x1xf32> to vector<16x32xf32>
    %20 = arith.subf %0, %19 : vector<16x32xf32>
    %21 = arith.mulf %20, %20 : vector<16x32xf32>
    %cst_22 = arith.constant dense<0.000000e+00> : vector<16xf32>
    %22 = vector.multi_reduction <add>, %21, %cst_22 [1] : vector<16x32xf32> to vector<16xf32>
    %23 = vector.shape_cast %22 : vector<16xf32> to vector<16x1xf32>
    %cst_23 = arith.constant 3.200000e+01 : f32
    %24 = vector.broadcast %cst_23 : f32 to vector<16x1xf32>
    %25 = arith.divf %23, %24 : vector<16x1xf32>
    %26 = vector.broadcast %18 : vector<16x1xf32> to vector<16x32xf32>
    %27 = arith.subf %0, %26 : vector<16x32xf32>
    %cst_24 = arith.constant 9.99999974E-6 : f32
    %28 = vector.broadcast %cst_24 : f32 to vector<16x1xf32>
    %29 = arith.addf %25, %28 : vector<16x1xf32>
    %30 = math.rsqrt %29 : vector<16x1xf32>
    %31 = vector.broadcast %30 : vector<16x1xf32> to vector<16x32xf32>
    %32 = arith.mulf %27, %31 : vector<16x32xf32>
    %33 = vector.broadcast %1 : vector<1x32xf32> to vector<16x32xf32>
    %34 = arith.mulf %32, %33 : vector<16x32xf32>
    %35 = vector.broadcast %2 : vector<1x32xf32> to vector<16x32xf32>
    %36 = arith.addf %34, %35 : vector<16x32xf32>
    %37 = arith.truncf %36 : vector<16x32xf32> to vector<16x32xbf16>
    %cst_25 = arith.constant dense<0.000000e+00> : vector<16x96xf32>
    %38 = tpu.matmul %37, %10, %cst_25 {dimension_numbers = #tpu.dot_dimension_numbers<[1], [0], [0], [1], [0, 0, 1, 1], [], []>} : vector<16x32xbf16>, vector<32x96xbf16>, vector<16x96xf32> -> vector<16x96xf32>
    %39 = vector.broadcast %5 : vector<1x96xf32> to vector<16x96xf32>
    %40 = arith.addf %38, %39 : vector<16x96xf32>
    %41 = vector.extract_strided_slice %40 {offsets = [0, 0], sizes = [16, 32], strides = [1, 1]} : vector<16x96xf32> to vector<16x32xf32>
    %42 = arith.truncf %41 : vector<16x32xf32> to vector<16x32xbf16>
    %43 = vector.extract_strided_slice %40 {offsets = [0, 32], sizes = [16, 32], strides = [1, 1]} : vector<16x96xf32> to vector<16x32xf32>
    %44 = arith.truncf %43 : vector<16x32xf32> to vector<16x32xbf16>
    %45 = vector.extract_strided_slice %40 {offsets = [0, 64], sizes = [16, 32], strides = [1, 1]} : vector<16x96xf32> to vector<16x32xf32>
    %46 = arith.truncf %45 : vector<16x32xf32> to vector<16x32xbf16>
    %47 = tpu.concatenate %44, %44, %44, %44 in 0 : vector<16x32xbf16>, vector<16x32xbf16>, vector<16x32xbf16>, vector<16x32xbf16> -> vector<64x32xbf16>
    %48 = arith.mulf %47, %14 : vector<64x32xbf16>
    %49 = tpu.concatenate %46, %46, %46, %46 in 0 : vector<16x32xbf16>, vector<16x32xbf16>, vector<16x32xbf16>, vector<16x32xbf16> -> vector<64x32xbf16>
    %50 = arith.mulf %49, %14 : vector<64x32xbf16>
    %cst_26 = arith.constant dense<0.000000e+00> : vector<16x64xf32>
    %51 = tpu.matmul %42, %48, %cst_26 {dimension_numbers = #tpu.dot_dimension_numbers<[1], [1], [0], [0], [0, 0, 1, 0], [], []>} : vector<16x32xbf16>, vector<64x32xbf16>, vector<16x64xf32> -> vector<16x64xf32>
    %cst_27 = arith.constant 0.353553385 : f32
    %52 = vector.broadcast %cst_27 : f32 to vector<16x64xf32>
    %53 = arith.mulf %51, %52 : vector<16x64xf32>
    %54 = arith.addf %53, %9 : vector<16x64xf32>
    %cst_28 = arith.constant dense<0xFF800000> : vector<16xf32>
    %55 = vector.multi_reduction <maximumf>, %54, %cst_28 [1] : vector<16x64xf32> to vector<16xf32>
    %56 = vector.shape_cast %55 : vector<16xf32> to vector<16x1xf32>
    %57 = vector.broadcast %56 : vector<16x1xf32> to vector<16x64xf32>
    %58 = arith.subf %54, %57 : vector<16x64xf32>
    %59 = math.exp %58 : vector<16x64xf32>
    %60 = arith.truncf %59 : vector<16x64xf32> to vector<16x64xbf16>
    %cst_29 = arith.constant dense<0.000000e+00> : vector<16x32xf32>
    %61 = tpu.matmul %60, %50, %cst_29 {dimension_numbers = #tpu.dot_dimension_numbers<[1], [0], [0], [1], [0, 0, 1, 1], [], []>} : vector<16x64xbf16>, vector<64x32xbf16>, vector<16x32xf32> -> vector<16x32xf32>
    %cst_30 = arith.constant dense<0.000000e+00> : vector<16x32xf32>
    %62 = tpu.matmul %60, %14, %cst_30 {dimension_numbers = #tpu.dot_dimension_numbers<[1], [0], [0], [1], [0, 0, 1, 1], [], []>} : vector<16x64xbf16>, vector<64x32xbf16>, vector<16x32xf32> -> vector<16x32xf32>
    %63 = tpu.reciprocal %62 {approx = true} : vector<16x32xf32> -> vector<16x32xf32>
    %64 = arith.mulf %61, %63 : vector<16x32xf32>
    %65 = arith.truncf %64 : vector<16x32xf32> to vector<16x32xbf16>
    %cst_31 = arith.constant dense<0.000000e+00> : vector<16x32xf32>
    %66 = tpu.matmul %65, %11, %cst_31 {dimension_numbers = #tpu.dot_dimension_numbers<[1], [0], [0], [1], [0, 0, 1, 1], [], []>} : vector<16x32xbf16>, vector<32x32xbf16>, vector<16x32xf32> -> vector<16x32xf32>
    %67 = vector.broadcast %6 : vector<1x32xf32> to vector<16x32xf32>
    %68 = arith.addf %66, %67 : vector<16x32xf32>
    %69 = arith.addf %0, %68 : vector<16x32xf32>
    %cst_32 = arith.constant dense<0.000000e+00> : vector<16xf32>
    %70 = vector.multi_reduction <add>, %69, %cst_32 [1] : vector<16x32xf32> to vector<16xf32>
    %71 = vector.shape_cast %70 : vector<16xf32> to vector<16x1xf32>
    %cst_33 = arith.constant 3.200000e+01 : f32
    %72 = vector.broadcast %cst_33 : f32 to vector<16x1xf32>
    %73 = arith.divf %71, %72 : vector<16x1xf32>
    %74 = vector.broadcast %73 : vector<16x1xf32> to vector<16x32xf32>
    %75 = arith.subf %69, %74 : vector<16x32xf32>
    %76 = arith.mulf %75, %75 : vector<16x32xf32>
    %cst_34 = arith.constant dense<0.000000e+00> : vector<16xf32>
    %77 = vector.multi_reduction <add>, %76, %cst_34 [1] : vector<16x32xf32> to vector<16xf32>
    %78 = vector.shape_cast %77 : vector<16xf32> to vector<16x1xf32>
    %cst_35 = arith.constant 3.200000e+01 : f32
    %79 = vector.broadcast %cst_35 : f32 to vector<16x1xf32>
    %80 = arith.divf %78, %79 : vector<16x1xf32>
    %81 = vector.broadcast %73 : vector<16x1xf32> to vector<16x32xf32>
    %82 = arith.subf %69, %81 : vector<16x32xf32>
    %cst_36 = arith.constant 9.99999974E-6 : f32
    %83 = vector.broadcast %cst_36 : f32 to vector<16x1xf32>
    %84 = arith.addf %80, %83 : vector<16x1xf32>
    %85 = math.rsqrt %84 : vector<16x1xf32>
    %86 = vector.broadcast %85 : vector<16x1xf32> to vector<16x32xf32>
    %87 = arith.mulf %82, %86 : vector<16x32xf32>
    %88 = vector.broadcast %3 : vector<1x32xf32> to vector<16x32xf32>
    %89 = arith.mulf %87, %88 : vector<16x32xf32>
    %90 = vector.broadcast %4 : vector<1x32xf32> to vector<16x32xf32>
    %91 = arith.addf %89, %90 : vector<16x32xf32>
    %92 = arith.truncf %91 : vector<16x32xf32> to vector<16x32xbf16>
    %cst_37 = arith.constant dense<0.000000e+00> : vector<16x128xf32>
    %93 = tpu.matmul %92, %12, %cst_37 {dimension_numbers = #tpu.dot_dimension_numbers<[1], [0], [0], [1], [0, 0, 1, 1], [], []>} : vector<16x32xbf16>, vector<32x128xbf16>, vector<16x128xf32> -> vector<16x128xf32>
    %94 = vector.broadcast %7 : vector<1x128xf32> to vector<16x128xf32>
    %95 = arith.addf %93, %94 : vector<16x128xf32>
    %cst_38 = arith.constant 1.702000e+00 : f32
    %96 = vector.broadcast %cst_38 : f32 to vector<16x128xf32>
    %97 = arith.mulf %96, %95 : vector<16x128xf32>
    %98 = arith.negf %97 : vector<16x128xf32>
    %99 = math.exp %98 : vector<16x128xf32>
    %cst_39 = arith.constant 1.000000e+00 : f32
    %100 = vector.broadcast %cst_39 : f32 to vector<16x128xf32>
    %101 = arith.addf %100, %99 : vector<16x128xf32>
    %102 = arith.divf %100, %101 : vector<16x128xf32>
    %103 = arith.mulf %95, %102 : vector<16x128xf32>
    %104 = arith.truncf %103 : vector<16x128xf32> to vector<16x128xbf16>
    %cst_40 = arith.constant dense<0.000000e+00> : vector<16x32xf32>
    %105 = tpu.matmul %104, %13, %cst_40 {dimension_numbers = #tpu.dot_dimension_numbers<[1], [0], [0], [1], [0, 0, 1, 1], [], []>} : vector<16x128xbf16>, vector<128x32xbf16>, vector<16x32xf32> -> vector<16x32xf32>
    %106 = vector.broadcast %8 : vector<1x32xf32> to vector<16x32xf32>
    %107 = arith.addf %105, %106 : vector<16x32xf32>
    %108 = arith.addf %69, %107 : vector<16x32xf32>
    %c0_41 = arith.constant 0 : index
    %c0_42 = arith.constant 0 : index
    %109 = vector.load %arg4[%c0_41, %c0_42] : memref<16x32xf32, #tpu.memory_space<vmem>>, vector<16x32xf32>
    tpu.vector_store %arg4[%c0_41, %c0_42], %108 {strides = array<i32>} : memref<16x32xf32, #tpu.memory_space<vmem>>, vector<16x32xf32>,
    return
  }
}

</mosaic_0001>

<llo_original>
// kernel: residual_attention_block.1
$region0: #{residual_attention_block.1}
  #allocation0 [shape = 'u32[]', space=smem, size = 0x4, offset = 0x4, fixed_abs, tag = 'smem constant byte address 0x4 - core index']
  #allocation1 [shape = 'u32[144,128]{1,0:T(1,128)}', space=vmem, size = 0x12000, scoped, tag = 'internal scratch']
  %s0 = inlined_call_operand.vmem [shape: f32[16,32], index: 0, kind: input, shape index: {}]
  %s1 = inlined_call_operand.vmem [shape: bf16[32,256], index: 1, kind: input, shape index: {}]
  %s2 = inlined_call_operand.vmem [shape: bf16[192,32], index: 2, kind: input, shape index: {}]
  %s3 = inlined_call_operand.vmem [shape: f32[24,128], index: 3, kind: input, shape index: {}]
  %s4 = inlined_call_operand.hbm [shape: f32[16,32], index: 4, kind: output, shape index: {}]
  %s5 = sld [smem:[#allocation0]]
  $region26: #{residual_attention_block.1} parent=0
    _
  %s7 = ssub.s32 1, %s5
  %s8 = scalar_select 0, %s7, %s5
  $region1: #{residual_attention_block.1} parent=0
    #allocation2 [shape = 'u8[8192]{0}', space=vmem, size = 0x2000, scoped, tag = 'output window, operand 0, single buffered']
    #allocation3 [shape = 's32[1]{0}', space=sflag, size = 0x4, scoped, tag = 'scoped memory for residual_attention_block.1']
    %9 = vsyncpa [#allocation3], 0
    // Predicated region
    $region2: #{residual_attention_block.1} parent=1 // pred_check
      _
    $region3: #{residual_attention_block.1} parent=1 // pred_check_branch
      %11 = sbr.rel (0) target = $region5
    $region4: #{residual_attention_block.1} parent=1 // pred_region
      _
    $region5: #{residual_attention_block.1} parent=1 // pred_fallthru
      _
    // Predicated region
    $region6: #{residual_attention_block.1} parent=1 // pred_check
      _
    $region7: #{residual_attention_block.1} parent=1 // pred_check_branch
      %13 = sbr.rel (0) target = $region9
    $region8: #{residual_attention_block.1} parent=1 // pred_region
      _
    $region9: #{residual_attention_block.1} parent=1 // pred_fallthru
      _
    // Predicated region
    $region10: #{residual_attention_block.1} parent=1 // pred_check
      _
    $region11: #{residual_attention_block.1} parent=1 // pred_check_branch
      %15 = sbr.rel (0) target = $region13
    $region12: #{residual_attention_block.1} parent=1 // pred_region
      _
    $region13: #{residual_attention_block.1} parent=1 // pred_fallthru
      _
    // Predicated region
    $region14: #{residual_attention_block.1} parent=1 // pred_check
      _
    $region15: #{residual_attention_block.1} parent=1 // pred_check_branch
      %17 = sbr.rel (0) target = $region17
    $region16: #{residual_attention_block.1} parent=1 // pred_region
      _
    $region17: #{residual_attention_block.1} parent=1 // pred_fallthru
      _
    %v19 = vld [vmem:[%s0] sm:$0xff]
    %v20 = vld [vmem:[%s0 + $0x8] sm:$0xff]
    %v21 = vld [vmem:[%s3] sm:$0x1]
    %v22 = vld [vmem:[%s3 + $0x1] sm:$0x1]
    %v23 = vld [vmem:[%s3 + $0x2] sm:$0x1]
    %v24 = vld [vmem:[%s3 + $0x3] sm:$0x1]
    %v25 = vld [vmem:[%s3 + $0x8] sm:$0xff]
    %v26 = vld [vmem:[%s3 + $0x10] sm:$0xff]
    %v27 = vld [vmem:[%s1] sm:$0xf]
    %v28 = vld [vmem:[%s1 + $0x8] sm:$0xf]
    %v29 = vld [vmem:[%s1 + $0x10] sm:$0xf]
    %v30 = vld [vmem:[%s1 + $0x18] sm:$0xf]
    %v31 = vld [vmem:[%s1 + $0x4] sm:$0xf]
    %v32 = vld [vmem:[%s1 + $0xc] sm:$0xf]
    %v33 = vld [vmem:[%s1 + $0x14] sm:$0xf]
    %v34 = vld [vmem:[%s1 + $0x1c] sm:$0xf]
    %v35 = vld [vmem:[%s2] sm:$0xf]
    %v36 = vld [vmem:[%s2 + $0x4] sm:$0xf]
    %v37 = vld [vmem:[%s2 + $0x8] sm:$0xf]
    %v38 = vld [vmem:[%s2 + $0xc] sm:$0xf]
    %v39 = vld [vmem:[%s2 + $0x10] sm:$0xf]
    %v40 = vld [vmem:[%s2 + $0x14] sm:$0xf]
    %v41 = vld [vmem:[%s2 + $0x18] sm:$0xf]
    %v42 = vld [vmem:[%s2 + $0x1c] sm:$0xf]
    %v43 = vld [vmem:[%s2 + $0x20] sm:$0xf]
    %v44 = vld [vmem:[%s2 + $0x24] sm:$0xf]
    %v45 = vld [vmem:[%s2 + $0x28] sm:$0xf]
    %v46 = vld [vmem:[%s2 + $0x2c] sm:$0xf]
    %v47 = vld [vmem:[%s2 + $0x30] sm:$0xf]
    %v48 = vld [vmem:[%s2 + $0x34] sm:$0xf]
    %v49 = vld [vmem:[%s2 + $0x38] sm:$0xf]
    %v50 = vld [vmem:[%s2 + $0x3c] sm:$0xf]
    %v51 = vld [vmem:[%s2 + $0x40] sm:$0xf]
    %v52 = vld [vmem:[%s2 + $0x44] sm:$0xf]
    %v53 = vld [vmem:[%s2 + $0x48] sm:$0xf]
    %v54 = vld [vmem:[%s2 + $0x4c] sm:$0xf]
    %v55 = vld [vmem:[%s2 + $0x50] sm:$0xf]
    %v56 = vld [vmem:[%s2 + $0x54] sm:$0xf]
    %v57 = vld [vmem:[%s2 + $0x58] sm:$0xf]
    %v58 = vld [vmem:[%s2 + $0x5c] sm:$0xf]
    %vm59 = vcmask 261120
    %v60 = vsel %vm59, %v19, 0.0
    %61 = vadd.xlane.f32.xlu0 %v60
    %v62 = vpop.xlane.xlu0 %61
    %v63 = vsel %vm59, %v20, 0.0
    %64 = vadd.xlane.f32.xlu0 %v63
    %v65 = vpop.xlane.xlu0 %64
    %v66 = vrcp.pop 32.0
    %v67 = vmul.f32 %v62, %v66
    %v68 = vmul.f32 %v65, %v66
    %v69 = vsub.f32 %v19, %v67
    %v70 = vsub.f32 %v20, %v68
    %v71 = vmul.f32 %v69, %v69
    %v72 = vmul.f32 %v70, %v70
    %v73 = vsel %vm59, %v71, 0.0
    %74 = vadd.xlane.f32.xlu0 %v73
    %v75 = vpop.xlane.xlu0 %74
    %v76 = vsel %vm59, %v72, 0.0
    %77 = vadd.xlane.f32.xlu0 %v76
    %v78 = vpop.xlane.xlu0 %77
    %v79 = vmul.f32 %v75, %v66
    %v80 = vmul.f32 %v78, %v66
    %v81 = vadd.f32 %v79, 1e-05
    %v82 = vadd.f32 %v80, 1e-05
    %v83 = vrsqrt.pop %v81
    %v84 = vrsqrt.pop %v82
    %v85 = vmul.f32 %v69, %v83
    %v86 = vmul.f32 %v70, %v84
    %v87 = vlaneseq
    %v88 = vshrl.u32 %v87, 7
    %v89 = vsub.s32 0, %v88
    %v90 = vrot.slane %v21, %v89
    %v91 = vmul.f32 %v85, %v90
    %v92 = vmul.f32 %v86, %v90
    %94 = vrot.lane.b32.xlu0 %v90, 96
    %v95 = vpop.permute.xlu0 %94
    %v97 = vadd.f32 %v91, %v95
    %v98 = vadd.f32 %v92, %v95
    %v99 = vpack.c.bf16 %v98, %v97
    %v100 = vlaneseq
    %v101 = vshrl.u32 %v100, 7
    %v102 = vsub.s32 0, %v101
    %v103 = vrot.slane %v22, %v102
    %v108 = vunpack.c.l.b16 %v27
    %v109 = vunpack.c.l.b16 %v28
    %v110 = vunpack.c.l.b16 %v29
    %v111 = vunpack.c.l.b16 %v30
    %v112 = vpack.c.b16 %v109, %v108
    %v113 = vpack.c.b16 %v111, %v110
    %v117 = vsel %vm59, %v99, 0
    %119 = vmatprep.subr.bf16.mxu0 0
    %120 = vmatpush1.bf16.msra.mxu0 %v112
    %121 = vmatprep.subr.bf16.mxu0 0
    %122 = vmatpush1.bf16.msra.mxu0 %v113
    %123 = vmatprep.subr.bf16.mxu0 0
    %124 = vmatpush1.bf16.msra.mxu0 0
    %125 = vmatprep.subr.bf16.mxu0 0
    %126 = vmatpush1.bf16.msra.mxu0 0
    %127 = vmatprep.subr.bf16.mxu0 0
    %128 = vmatpush1.bf16.msra.mxu0 0
    %129 = vmatprep.subr.bf16.mxu0 0
    %130 = vmatpush1.bf16.msra.mxu0 0
    %131 = vmatprep.subr.bf16.mxu0 0
    %132 = vmatpush1.bf16.msra.mxu0 0
    %133 = vmatprep.subr.bf16.mxu0 0
    %134 = vmatpush1.bf16.msra.mxu0 0
    %135 = vmatprep.subr.bf16.mxu0 0
    %136 = vmatpush1.bf16.msra.mxu0 0
    %137 = vmatprep.subr.bf16.mxu0 0
    %138 = vmatpush1.bf16.msra.mxu0 0
    %139 = vmatprep.subr.bf16.mxu0 0
    %140 = vmatpush1.bf16.msra.mxu0 0
    %141 = vmatprep.subr.bf16.mxu0 0
    %142 = vmatpush1.bf16.msra.mxu0 0
    %143 = vmatprep.subr.bf16.mxu0 0
    %144 = vmatpush1.bf16.msra.mxu0 0
    %145 = vmatprep.subr.bf16.mxu0 0
    %146 = vmatpush1.bf16.msra.mxu0 0
    %147 = vmatprep.subr.bf16.mxu0 0
    %148 = vmatpush1.bf16.msra.mxu0 0
    %149 = vmatprep.subr.bf16.mxu0 0
    %150 = vmatpush1.bf16.msra.mxu0 0
    %151 = vmatprep.mubr.bf16.mxu0 0
    %152 = vmatmul.mubr.bf16.gmra.mrb[0].mxu0 %v117
    %v153 = vpop.f32.mrb[0].mxu0
    %v154 = vadd.f32 %v103, %v153
    %v155 = vpop.f32.mrb[0].mxu0
    %v156 = vpop.f32.mrb[0].mxu0
    %v157 = vadd.f32 %v103, %v156
    %v158 = vpop.f32.mrb[0].mxu0
    %159 = vdwg.mxu0
    %v160 = vpack.c.bf16 %v157, %v154
    %v169 = vunpack.c.l.b16 %v51
    %v170 = vunpack.c.l.b16 %v52
    %v171 = vunpack.c.l.b16 %v53
    %v172 = vunpack.c.l.b16 %v54
    %v173 = vunpack.c.l.b16 %v55
    %v174 = vunpack.c.l.b16 %v56
    %v175 = vunpack.c.l.b16 %v57
    %v176 = vunpack.c.l.b16 %v58
    %v177 = vpack.c.b16 %v170, %v169
    %v178 = vpack.c.b16 %v172, %v171
    %v179 = vpack.c.b16 %v174, %v173
    %v180 = vpack.c.b16 %v176, %v175
    %181 = vrot.lane.b32.xlu0 %v177, 32
    %v182 = vpop.permute.xlu0 %181
    %183 = vrot.lane.b32.xlu0 %v178, 32
    %v184 = vpop.permute.xlu0 %183
    %185 = vrot.lane.b32.xlu0 %v179, 32
    %v186 = vpop.permute.xlu0 %185
    %187 = vrot.lane.b32.xlu0 %v180, 32
    %v188 = vpop.permute.xlu0 %187
    %v193 = vmul.bf16 %v160, %v182
    %v194 = vmul.bf16 %v160, %v184
    %v195 = vmul.bf16 %v160, %v186
    %v196 = vmul.bf16 %v160, %v188
    %197 = vrot.lane.b32.xlu0 %v177, 64
    %v198 = vpop.permute.xlu0 %197
    %199 = vrot.lane.b32.xlu0 %v178, 64
    %v200 = vpop.permute.xlu0 %199
    %201 = vrot.lane.b32.xlu0 %v179, 64
    %v202 = vpop.permute.xlu0 %201
    %203 = vrot.lane.b32.xlu0 %v180, 64
    %v204 = vpop.permute.xlu0 %203
    %v209 = vmul.bf16 %v160, %v198
    %v210 = vmul.bf16 %v160, %v200
    %v211 = vmul.bf16 %v160, %v202
    %v212 = vmul.bf16 %v160, %v204
    %217 = vrot.lane.b32.xlu0 %v193, 96
    %v218 = vpop.permute.xlu0 %217
    %219 = vrot.lane.b32.xlu0 %v194, 96
    %v220 = vpop.permute.xlu0 %219
    %221 = vrot.lane.b32.xlu0 %v195, 96
    %v222 = vpop.permute.xlu0 %221
    %223 = vrot.lane.b32.xlu0 %v196, 96
    %v224 = vpop.permute.xlu0 %223
    %v226 = vsel %vm59, %v160, 0
    %v229 = vsel %vm59, %v218, 0
    %v232 = vsel %vm59, %v220, 0
    %v235 = vsel %vm59, %v222, 0
    %v238 = vsel %vm59, %v224, 0
    %240 = vmatprep.subr.bf16.mxu0 0
    %241 = vmatpush1.bf16.xpose.msra.mxu0 %v229
    %242 = vmatprep.subr.bf16.mxu0 0
    %243 = vmatpush1.bf16.xpose.msra.mxu0 %v232
    %244 = vmatprep.subr.bf16.mxu0 0
    %245 = vmatpush1.bf16.xpose.msra.mxu0 %v235
    %246 = vmatprep.subr.bf16.mxu0 0
    %247 = vmatpush1.bf16.xpose.msra.mxu0 %v238
    %248 = vmatprep.subr.bf16.mxu0 0
    %249 = vmatpush1.bf16.xpose.msra.mxu0 0
    %250 = vmatprep.subr.bf16.mxu0 0
    %251 = vmatpush1.bf16.xpose.msra.mxu0 0
    %252 = vmatprep.subr.bf16.mxu0 0
    %253 = vmatpush1.bf16.xpose.msra.mxu0 0
    %254 = vmatprep.subr.bf16.mxu0 0
    %255 = vmatpush1.bf16.xpose.msra.mxu0 0
    %256 = vmatprep.subr.bf16.mxu0 0
    %257 = vmatpush1.bf16.xpose.msra.mxu0 0
    %258 = vmatprep.subr.bf16.mxu0 0
    %259 = vmatpush1.bf16.xpose.msra.mxu0 0
    %260 = vmatprep.subr.bf16.mxu0 0
    %261 = vmatpush1.bf16.xpose.msra.mxu0 0
    %262 = vmatprep.subr.bf16.mxu0 0
    %263 = vmatpush1.bf16.xpose.msra.mxu0 0
    %264 = vmatprep.subr.bf16.mxu0 0
    %265 = vmatpush1.bf16.xpose.msra.mxu0 0
    %266 = vmatprep.subr.bf16.mxu0 0
    %267 = vmatpush1.bf16.xpose.msra.mxu0 0
    %268 = vmatprep.subr.bf16.mxu0 0
    %269 = vmatpush1.bf16.xpose.msra.mxu0 0
    %270 = vmatprep.subr.bf16.mxu0 0
    %271 = vmatpush1.bf16.xpose.msra.mxu0 0
    %272 = vmatprep.mubr.bf16.mxu0 0
    %273 = vmatmul.mubr.bf16.gmra.mrb[0].mxu0 %v226
    %v274 = vpop.f32.mrb[0].mxu0
    %v275 = vadd.f32 0.0, %v274
    %v276 = vpop.f32.mrb[0].mxu0
    %v277 = vpop.f32.mrb[0].mxu0
    %v278 = vadd.f32 0.0, %v277
    %v279 = vpop.f32.mrb[0].mxu0
    %280 = vdwg.mxu0
    %v281 = vmul.f32 %v275, 0.35355338
    %v282 = vmul.f32 %v278, 0.35355338
    %v283 = vadd.f32 %v281, %v25
    %v284 = vadd.f32 %v282, %v26
    %vm285 = vcmask 523264
    %v286 = vsel %vm285, %v283, -inf
    %287 = vmax.xlane.f32.xlu0 %v286
    %v288 = vpop.xlane.xlu0 %287
    %v289 = vsel %vm285, %v284, -inf
    %290 = vmax.xlane.f32.xlu0 %v289
    %v291 = vpop.xlane.xlu0 %290
    %v292 = vsub.f32 %v283, %v288
    %v293 = vsub.f32 %v284, %v291
    %v294 = vmul.f32 %v292, 1.442695
    %v295 = vpow.pop %v294
    %v296 = vmul.f32 %v293, 1.442695
    %v297 = vpow.pop %v296
    %v298 = vpack.c.bf16 %v297, %v295
    %303 = vrot.lane.b32.xlu0 %v209, 64
    %v304 = vpop.permute.xlu0 %303
    %305 = vrot.lane.b32.xlu0 %v210, 64
    %v306 = vpop.permute.xlu0 %305
    %307 = vrot.lane.b32.xlu0 %v211, 64
    %v308 = vpop.permute.xlu0 %307
    %309 = vrot.lane.b32.xlu0 %v212, 64
    %v310 = vpop.permute.xlu0 %309
    %v316 = vsel %vm285, %v298, 0
    %318 = vmatprep.subr.bf16.mxu0 0
    %319 = vmatpush1.bf16.msra.mxu0 %v304
    %320 = vmatprep.subr.bf16.mxu0 0
    %321 = vmatpush1.bf16.msra.mxu0 %v306
    %322 = vmatprep.subr.bf16.mxu0 0
    %323 = vmatpush1.bf16.msra.mxu0 %v308
    %324 = vmatprep.subr.bf16.mxu0 0
    %325 = vmatpush1.bf16.msra.mxu0 %v310
    %326 = vmatprep.subr.bf16.mxu0 0
    %327 = vmatpush1.bf16.msra.mxu0 0
    %328 = vmatprep.subr.bf16.mxu0 0
    %329 = vmatpush1.bf16.msra.mxu0 0
    %330 = vmatprep.subr.bf16.mxu0 0
    %331 = vmatpush1.bf16.msra.mxu0 0
    %332 = vmatprep.subr.bf16.mxu0 0
    %333 = vmatpush1.bf16.msra.mxu0 0
    %334 = vmatprep.subr.bf16.mxu0 0
    %335 = vmatpush1.bf16.msra.mxu0 0
    %336 = vmatprep.subr.bf16.mxu0 0
    %337 = vmatpush1.bf16.msra.mxu0 0
    %338 = vmatprep.subr.bf16.mxu0 0
    %339 = vmatpush1.bf16.msra.mxu0 0
    %340 = vmatprep.subr.bf16.mxu0 0
    %341 = vmatpush1.bf16.msra.mxu0 0
    %342 = vmatprep.subr.bf16.mxu0 0
    %343 = vmatpush1.bf16.msra.mxu0 0
    %344 = vmatprep.subr.bf16.mxu0 0
    %345 = vmatpush1.bf16.msra.mxu0 0
    %346 = vmatprep.subr.bf16.mxu0 0
    %347 = vmatpush1.bf16.msra.mxu0 0
    %348 = vmatprep.subr.bf16.mxu0 0
    %349 = vmatpush1.bf16.msra.mxu0 0
    %350 = vmatprep.mubr.bf16.mxu0 0
    %351 = vmatmul.mubr.bf16.gmra.mrb[0].mxu0 %v316
    %v352 = vpop.f32.mrb[0].mxu0
    %v353 = vadd.f32 0.0, %v352
    %v354 = vpop.f32.mrb[0].mxu0
    %v355 = vpop.f32.mrb[0].mxu0
    %v356 = vadd.f32 0.0, %v355
    %v357 = vpop.f32.mrb[0].mxu0
    %358 = vdwg.mxu0
    %363 = vmatprep.subr.bf16.mxu0 0
    %364 = vmatpush1.bf16.msra.mxu0 %v177
    %365 = vmatprep.subr.bf16.mxu0 0
    %366 = vmatpush1.bf16.msra.mxu0 %v178
    %367 = vmatprep.subr.bf16.mxu0 0
    %368 = vmatpush1.bf16.msra.mxu0 %v179
    %369 = vmatprep.subr.bf16.mxu0 0
    %370 = vmatpush1.bf16.msra.mxu0 %v180
    %371 = vmatprep.subr.bf16.mxu0 0
    %372 = vmatpush1.bf16.msra.mxu0 0
    %373 = vmatprep.subr.bf16.mxu0 0
    %374 = vmatpush1.bf16.msra.mxu0 0
    %375 = vmatprep.subr.bf16.mxu0 0
    %376 = vmatpush1.bf16.msra.mxu0 0
    %377 = vmatprep.subr.bf16.mxu0 0
    %378 = vmatpush1.bf16.msra.mxu0 0
    %379 = vmatprep.subr.bf16.mxu0 0
    %380 = vmatpush1.bf16.msra.mxu0 0
    %381 = vmatprep.subr.bf16.mxu0 0
    %382 = vmatpush1.bf16.msra.mxu0 0
    %383 = vmatprep.subr.bf16.mxu0 0
    %384 = vmatpush1.bf16.msra.mxu0 0
    %385 = vmatprep.subr.bf16.mxu0 0
    %386 = vmatpush1.bf16.msra.mxu0 0
    %387 = vmatprep.subr.bf16.mxu0 0
    %388 = vmatpush1.bf16.msra.mxu0 0
    %389 = vmatprep.subr.bf16.mxu0 0
    %390 = vmatpush1.bf16.msra.mxu0 0
    %391 = vmatprep.subr.bf16.mxu0 0
    %392 = vmatpush1.bf16.msra.mxu0 0
    %393 = vmatprep.subr.bf16.mxu0 0
    %394 = vmatpush1.bf16.msra.mxu0 0
    %395 = vmatprep.mubr.bf16.mxu0 0
    %396 = vmatmul.mubr.bf16.gmra.mrb[0].mxu0 %v316
    %v397 = vpop.f32.mrb[0].mxu0
    %v398 = vadd.f32 0.0, %v397
    %v399 = vpop.f32.mrb[0].mxu0
    %v400 = vpop.f32.mrb[0].mxu0
    %v401 = vadd.f32 0.0, %v400
    %v402 = vpop.f32.mrb[0].mxu0
    %403 = vdwg.mxu0
    %v404 = vrcp.pop %v398
    %v405 = vrcp.pop %v401
    %v406 = vmul.f32 %v353, %v404
    %v407 = vmul.f32 %v356, %v405
    %v408 = vpack.c.bf16 %v407, %v406
    %409 = vrot.lane.b32.xlu0 %v112, 32
    %v410 = vpop.permute.xlu0 %409
    %411 = vrot.lane.b32.xlu0 %v113, 32
    %v412 = vpop.permute.xlu0 %411
    %416 = vrot.lane.b32.xlu0 %v103, 32
    %v417 = vpop.permute.xlu0 %416
    %v420 = vsel %vm59, %v408, 0
    %422 = vmatprep.subr.bf16.mxu0 0
    %423 = vmatpush1.bf16.msra.mxu0 %v410
    %424 = vmatprep.subr.bf16.mxu0 0
    %425 = vmatpush1.bf16.msra.mxu0 %v412
    %426 = vmatprep.subr.bf16.mxu0 0
    %427 = vmatpush1.bf16.msra.mxu0 0
    %428 = vmatprep.subr.bf16.mxu0 0
    %429 = vmatpush1.bf16.msra.mxu0 0
    %430 = vmatprep.subr.bf16.mxu0 0
    %431 = vmatpush1.bf16.msra.mxu0 0
    %432 = vmatprep.subr.bf16.mxu0 0
    %433 = vmatpush1.bf16.msra.mxu0 0
    %434 = vmatprep.subr.bf16.mxu0 0
    %435 = vmatpush1.bf16.msra.mxu0 0
    %436 = vmatprep.subr.bf16.mxu0 0
    %437 = vmatpush1.bf16.msra.mxu0 0
    %438 = vmatprep.subr.bf16.mxu0 0
    %439 = vmatpush1.bf16.msra.mxu0 0
    %440 = vmatprep.subr.bf16.mxu0 0
    %441 = vmatpush1.bf16.msra.mxu0 0
    %442 = vmatprep.subr.bf16.mxu0 0
    %443 = vmatpush1.bf16.msra.mxu0 0
    %444 = vmatprep.subr.bf16.mxu0 0
    %445 = vmatpush1.bf16.msra.mxu0 0
    %446 = vmatprep.subr.bf16.mxu0 0
    %447 = vmatpush1.bf16.msra.mxu0 0
    %448 = vmatprep.subr.bf16.mxu0 0
    %449 = vmatpush1.bf16.msra.mxu0 0
    %450 = vmatprep.subr.bf16.mxu0 0
    %451 = vmatpush1.bf16.msra.mxu0 0
    %452 = vmatprep.subr.bf16.mxu0 0
    %453 = vmatpush1.bf16.msra.mxu0 0
    %454 = vmatprep.mubr.bf16.mxu0 0
    %455 = vmatmul.mubr.bf16.gmra.mrb[0].mxu0 %v420
    %v456 = vpop.f32.mrb[0].mxu0
    %v457 = vadd.f32 %v417, %v456
    %v458 = vpop.f32.mrb[0].mxu0
    %v459 = vpop.f32.mrb[0].mxu0
    %v460 = vadd.f32 %v417, %v459
    %v461 = vpop.f32.mrb[0].mxu0
    %462 = vdwg.mxu0
    %v463 = vadd.f32 %v19, %v457
    %v464 = vadd.f32 %v20, %v460
    %v465 = vsel %vm59, %v463, 0.0
    %466 = vadd.xlane.f32.xlu0 %v465
    %v467 = vpop.xlane.xlu0 %466
    %v468 = vsel %vm59, %v464, 0.0
    %469 = vadd.xlane.f32.xlu0 %v468
    %v470 = vpop.xlane.xlu0 %469
    %v471 = vmul.f32 %v467, %v66
    %v472 = vmul.f32 %v470, %v66
    %v473 = vsub.f32 %v463, %v471
    %v474 = vsub.f32 %v464, %v472
    %v475 = vmul.f32 %v473, %v473
    %v476 = vmul.f32 %v474, %v474
    %v477 = vsel %vm59, %v475, 0.0
    %478 = vadd.xlane.f32.xlu0 %v477
    %v479 = vpop.xlane.xlu0 %478
    %v480 = vsel %vm59, %v476, 0.0
    %481 = vadd.xlane.f32.xlu0 %v480
    %v482 = vpop.xlane.xlu0 %481
    %v483 = vmul.f32 %v479, %v66
    %v484 = vmul.f32 %v482, %v66
    %v485 = vadd.f32 %v483, 1e-05
    %v486 = vadd.f32 %v484, 1e-05
    %v487 = vrsqrt.pop %v485
    %v488 = vrsqrt.pop %v486
    %v489 = vmul.f32 %v473, %v487
    %v490 = vmul.f32 %v474, %v488
    %491 = vrot.lane.b32.xlu0 %v90, 64
    %v492 = vpop.permute.xlu0 %491
    %v494 = vmul.f32 %v489, %v492
    %v495 = vmul.f32 %v490, %v492
    %496 = vrot.lane.b32.xlu0 %v90, 32
    %v497 = vpop.permute.xlu0 %496
    %v499 = vadd.f32 %v494, %v497
    %v500 = vadd.f32 %v495, %v497
    %v501 = vpack.c.bf16 %v500, %v499
    %v502 = vlaneseq
    %v503 = vshrl.u32 %v502, 7
    %v504 = vsub.s32 0, %v503
    %v505 = vrot.slane %v23, %v504
    %v510 = vunpack.c.l.b16 %v31
    %v511 = vunpack.c.l.b16 %v32
    %v512 = vunpack.c.l.b16 %v33
    %v513 = vunpack.c.l.b16 %v34
    %v514 = vpack.c.b16 %v511, %v510
    %v515 = vpack.c.b16 %v513, %v512
    %v519 = vsel %vm59, %v501, 0
    %521 = vmatprep.subr.bf16.mxu0 0
    %522 = vmatpush1.bf16.msra.mxu0 %v514
    %523 = vmatprep.subr.bf16.mxu0 0
    %524 = vmatpush1.bf16.msra.mxu0 %v515
    %525 = vmatprep.subr.bf16.mxu0 0
    %526 = vmatpush1.bf16.msra.mxu0 0
    %527 = vmatprep.subr.bf16.mxu0 0
    %528 = vmatpush1.bf16.msra.mxu0 0
    %529 = vmatprep.subr.bf16.mxu0 0
    %530 = vmatpush1.bf16.msra.mxu0 0
    %531 = vmatprep.subr.bf16.mxu0 0
    %532 = vmatpush1.bf16.msra.mxu0 0
    %533 = vmatprep.subr.bf16.mxu0 0
    %534 = vmatpush1.bf16.msra.mxu0 0
    %535 = vmatprep.subr.bf16.mxu0 0
    %536 = vmatpush1.bf16.msra.mxu0 0
    %537 = vmatprep.subr.bf16.mxu0 0
    %538 = vmatpush1.bf16.msra.mxu0 0
    %539 = vmatprep.subr.bf16.mxu0 0
    %540 = vmatpush1.bf16.msra.mxu0 0
    %541 = vmatprep.subr.bf16.mxu0 0
    %542 = vmatpush1.bf16.msra.mxu0 0
    %543 = vmatprep.subr.bf16.mxu0 0
    %544 = vmatpush1.bf16.msra.mxu0 0
    %545 = vmatprep.subr.bf16.mxu0 0
    %546 = vmatpush1.bf16.msra.mxu0 0
    %547 = vmatprep.subr.bf16.mxu0 0
    %548 = vmatpush1.bf16.msra.mxu0 0
    %549 = vmatprep.subr.bf16.mxu0 0
    %550 = vmatpush1.bf16.msra.mxu0 0
    %551 = vmatprep.subr.bf16.mxu0 0
    %552 = vmatpush1.bf16.msra.mxu0 0
    %553 = vmatprep.mubr.bf16.mxu0 0
    %554 = vmatmul.mubr.bf16.gmra.mrb[0].mxu0 %v519
    %v555 = vpop.f32.mrb[0].mxu0
    %v556 = vadd.f32 %v505, %v555
    %v557 = vpop.f32.mrb[0].mxu0
    %v558 = vpop.f32.mrb[0].mxu0
    %v559 = vadd.f32 %v505, %v558
    %v560 = vpop.f32.mrb[0].mxu0
    %561 = vdwg.mxu0
    %v562 = vmul.f32 %v556, 1.702
    %v563 = vmul.f32 %v559, 1.702
    %v564 = vxor.u32 %v562, 2147483648
    %v565 = vxor.u32 %v563, 2147483648
    %v566 = vmul.f32 %v564, 1.442695
    %v567 = vpow.pop %v566
    %v568 = vmul.f32 %v565, 1.442695
    %v569 = vpow.pop %v568
    %v570 = vadd.f32 %v567, 1.0
    %v571 = vadd.f32 %v569, 1.0
    %v572 = vrcp.pop %v570
    %v573 = vmul.f32 1.0, %v572
    %v574 = vrcp.pop %v571
    %v575 = vmul.f32 1.0, %v574
    %v576 = vmul.f32 %v556, %v573
    %v577 = vmul.f32 %v559, %v575
    %v578 = vpack.c.bf16 %v577, %v576
    %v579 = vlaneseq
    %v580 = vshrl.u32 %v579, 7
    %v581 = vsub.s32 0, %v580
    %v582 = vrot.slane %v24, %v581
    %v599 = vunpack.c.l.b16 %v35
    %v600 = vunpack.c.l.b16 %v36
    %v601 = vunpack.c.l.b16 %v37
    %v602 = vunpack.c.l.b16 %v38
    %v603 = vunpack.c.l.b16 %v39
    %v604 = vunpack.c.l.b16 %v40
    %v605 = vunpack.c.l.b16 %v41
    %v606 = vunpack.c.l.b16 %v42
    %v607 = vunpack.c.l.b16 %v43
    %v608 = vunpack.c.l.b16 %v44
    %v609 = vunpack.c.l.b16 %v45
    %v610 = vunpack.c.l.b16 %v46
    %v611 = vunpack.c.l.b16 %v47
    %v612 = vunpack.c.l.b16 %v48
    %v613 = vunpack.c.l.b16 %v49
    %v614 = vunpack.c.l.b16 %v50
    %v615 = vpack.c.b16 %v600, %v599
    %v616 = vpack.c.b16 %v602, %v601
    %v617 = vpack.c.b16 %v604, %v603
    %v618 = vpack.c.b16 %v606, %v605
    %v619 = vpack.c.b16 %v608, %v607
    %v620 = vpack.c.b16 %v610, %v609
    %v621 = vpack.c.b16 %v612, %v611
    %v622 = vpack.c.b16 %v614, %v613
    %631 = vmatprep.subr.bf16.mxu0 0
    %632 = vmatpush1.bf16.msra.mxu0 %v615
    %633 = vmatprep.subr.bf16.mxu0 0
    %634 = vmatpush1.bf16.msra.mxu0 %v616
    %635 = vmatprep.subr.bf16.mxu0 0
    %636 = vmatpush1.bf16.msra.mxu0 %v617
    %637 = vmatprep.subr.bf16.mxu0 0
    %638 = vmatpush1.bf16.msra.mxu0 %v618
    %639 = vmatprep.subr.bf16.mxu0 0
    %640 = vmatpush1.bf16.msra.mxu0 %v619
    %641 = vmatprep.subr.bf16.mxu0 0
    %642 = vmatpush1.bf16.msra.mxu0 %v620
    %643 = vmatprep.subr.bf16.mxu0 0
    %644 = vmatpush1.bf16.msra.mxu0 %v621
    %645 = vmatprep.subr.bf16.mxu0 0
    %646 = vmatpush1.bf16.msra.mxu0 %v622
    %647 = vmatprep.subr.bf16.mxu0 0
    %648 = vmatpush1.bf16.msra.mxu0 0
    %649 = vmatprep.subr.bf16.mxu0 0
    %650 = vmatpush1.bf16.msra.mxu0 0
    %651 = vmatprep.subr.bf16.mxu0 0
    %652 = vmatpush1.bf16.msra.mxu0 0
    %653 = vmatprep.subr.bf16.mxu0 0
    %654 = vmatpush1.bf16.msra.mxu0 0
    %655 = vmatprep.subr.bf16.mxu0 0
    %656 = vmatpush1.bf16.msra.mxu0 0
    %657 = vmatprep.subr.bf16.mxu0 0
    %658 = vmatpush1.bf16.msra.mxu0 0
    %659 = vmatprep.subr.bf16.mxu0 0
    %660 = vmatpush1.bf16.msra.mxu0 0
    %661 = vmatprep.subr.bf16.mxu0 0
    %662 = vmatpush1.bf16.msra.mxu0 0
    %663 = vmatprep.mubr.bf16.mxu0 0
    %664 = vmatmul.mubr.bf16.gmra.mrb[0].mxu0 %v578
    %v665 = vpop.f32.mrb[0].mxu0
    %v666 = vadd.f32 %v582, %v665
    %v667 = vpop.f32.mrb[0].mxu0
    %v668 = vpop.f32.mrb[0].mxu0
    %v669 = vadd.f32 %v582, %v668
    %v670 = vpop.f32.mrb[0].mxu0
    %671 = vdwg.mxu0
    %v672 = vadd.f32 %v463, %v666
    %v673 = vadd.f32 %v464, %v669
    %674 = vst.msk [vmem:[#allocation2] sm:$0xff] %vm59, %v672
    %675 = vst.msk [vmem:[#allocation2 + $0x8] sm:$0xff] %vm59, %v673
    // Predicated region
    $region18: #{residual_attention_block.1} parent=1 // pred_check
      _
    $region19: #{residual_attention_block.1} parent=1 // pred_check_branch
      %677 = sbr.rel (0) target = $region21
    $region20: #{residual_attention_block.1} parent=1 // pred_region
      %s679 = ssub.s32 256, 256
      %680 = vsyncadd [#allocation3], %s679
      %s681 = sshll.u32 [#allocation2], 4
      %s682 = int_to_ptr.vmem [resolvable:$true] %s681
      %687 = dma.vmem_to_hbm [thread:$0]  %s682, 256, %s4, [#allocation3], 128, 128, 8
    $region21: #{residual_attention_block.1} parent=1 // pred_fallthru
      _
    // Predicated region
    $region22: #{residual_attention_block.1} parent=1 // pred_check
      _
    $region23: #{residual_attention_block.1} parent=1 // pred_check_branch
      %689 = sbr.rel (0) target = $region25
    $region24: #{residual_attention_block.1} parent=1 // pred_region
      %690 = dma.done [#allocation3], 256
    $region25: #{residual_attention_block.1} parent=1 // pred_fallthru
      _
    %691 = vsyncpa [#allocation3], 1

</llo_original>
